<compile_context>
chip_gen: v7x
topology: tpu7x:2x2x1
jax: 0.10.0
libtpu: 0.0.40
codegen_flags: <defaults>
</compile_context>

<pallas_src>
import functools
import math

import jax
import jax.numpy as jnp
from jax.experimental import pallas as pl
from jax.experimental.pallas import tpu as pltpu


_MAX_LANE_TILE = 8192      # lane tile cap (multiple of 128)
_MAX_ROWS_PER_TILE = 128   # rows per block: keeps per-slice values register-sized


def _round_up(a, m):
    return ((a + m - 1) // m) * m


def _choose_row_pack(d):
    """Rows per sample R in {16, 8} and padded feature size (multiple of R*128)."""
    if d % 2048 == 0:
        return 16, d
    return 8, _round_up(d, 1024)


def _choose_lane_tile(row_w):
    """Largest divisor of row_w that is a multiple of 128 and <= cap."""
    t = min(row_w, _MAX_LANE_TILE)
    t -= t % 128
    while t >= 128:
        if row_w % t == 0:
            return t
        t -= 128
    return row_w


def _choose_sample_tile(batch, r, td, itemsize, shared_gt):
    """Samples per tile (TBS) and padded batch; out block needs TBS%8==0 or TBS==B_pad."""
    budget = 20 * 1024 * 1024  # double-buffered inputs, under the 32 MiB VMEM limit
    per_sample = 2 * r * td * itemsize * (1 if shared_gt else 2)
    cap = max(1, min(_MAX_ROWS_PER_TILE // r, budget // per_sample))
    if batch <= cap:
        return batch, batch                       # single/full tiles: TBS == B_pad
    for s in range(cap, 7, -1):                   # exact divisor, multiple of 8
        if s % 8 == 0 and batch % s == 0:
            return s, batch
    tbs = max(8, (cap // 8) * 8)                  # pad batch; pads are sliced off later
    return tbs, _round_up(batch, tbs)


def _sse_kernel(x_ref, gt_ref, out_ref, acc_ref, *, samples, rows):
    """Accumulate lane-reduced squared error into a (rows_blk, 128) scratch across
    lane tiles; on the last lane tile reduce to one SSE per sample."""
    k = pl.program_id(2)

    @pl.when(k == 0)
    def _init():
        acc_ref[...] = jnp.zeros_like(acc_ref)

    td = x_ref.shape[-1]
    n_rows = x_ref.shape[0]                 # samples * rows
    shared_gt = gt_ref.shape[0] != n_rows   # shared gt block is (rows, td)

    partial = None
    for c in range(td // 128):              # static, lane-aligned slices: no relayout
        sl = slice(c * 128, (c + 1) * 128)
        xs = x_ref[:, sl].astype(jnp.float32)           # (n_rows, 128)
        gs = gt_ref[:, sl].astype(jnp.float32)
        if shared_gt:
            # Broadcast shared gt across samples via a sublane-aligned free view
            # (rows % 8 == 0 always), so no copy is materialized.
            d = (xs.reshape(samples, rows, 128) - gs[None]).reshape(n_rows, 128)
        else:
            d = xs - gs
        d2 = d * d
        partial = d2 if partial is None else partial + d2
    acc_ref[...] += partial                  # single accumulator RMW per lane step

    @pl.when(k == pl.num_programs(2) - 1)
    def _finalize():
        acc = acc_ref[...].reshape(samples, rows, 128)     # free view (rows % 8 == 0)
        per_sample = jnp.sum(acc, axis=1)                  # (samples, 128)
        tot = jnp.sum(per_sample, axis=-1, keepdims=True)  # (samples, 1): one XLU reduce
        out_ref[...] = jnp.broadcast_to(tot, (samples, 128))


def psnr_pallas(x, gt):
    """x: [B, ...features], gt: [B or 1, ...same features] -> PSNR [B] f32 (peak=1)."""
    B = x.shape[0]
    D = int(math.prod(x.shape[1:]))
    assert gt.shape[1:] == x.shape[1:] and gt.shape[0] in (1, B), (x.shape, gt.shape)
    shared_gt = (gt.shape[0] == 1) and (B > 1)

    R, D_pad = _choose_row_pack(D)
    row_w = D_pad // R
    TD = _choose_lane_tile(row_w)
    TBS, B_pad = _choose_sample_tile(B, R, TD, x.dtype.itemsize, shared_gt)
    rows_blk = TBS * R

    # Flatten, zero-pad feature dim (zeros in both x and gt contribute 0 to SSE)
    # and zero-pad the batch (padded samples are sliced off after the kernel).
    xf = x.reshape(B, D)
    gf = gt.reshape(gt.shape[0], D)
    if D_pad > D:
        xf = jnp.pad(xf, ((0, 0), (0, D_pad - D)))
        gf = jnp.pad(gf, ((0, 0), (0, D_pad - D)))
    if B_pad > B:
        xf = jnp.pad(xf, ((0, B_pad - B), (0, 0)))
        if not shared_gt:
            gf = jnp.pad(gf, ((0, B_pad - B), (0, 0)))
    xf = xf.reshape(B_pad * R, row_w)

    n_lane = row_w // TD
    n_stile = B_pad // TBS
    # Engage both v7x TensorCores when the batch collapses to one sample tile:
    # split the lane reduction into two parallel halves (partial SSEs combined below).
    halves = 2 if (n_stile == 1 and n_lane >= 2 and n_lane % 2 == 0) else 1
    lane_steps = n_lane // halves

    if shared_gt:
        gf = gf.reshape(R, row_w)           # never broadcast in HBM
        gt_spec = pl.BlockSpec((R, TD), lambda h, b, k: (0, h * lane_steps + k))
    else:
        gf = gf.reshape(B_pad * R, row_w)
        gt_spec = pl.BlockSpec((rows_blk, TD), lambda h, b, k: (b, h * lane_steps + k))

    kernel = functools.partial(_sse_kernel, samples=TBS, rows=R)

    out = pl.pallas_call(
        kernel,
        grid=(halves, n_stile, lane_steps),
        in_specs=[
            pl.BlockSpec((rows_blk, TD), lambda h, b, k: (b, h * lane_steps + k)),
            gt_spec,
        ],
        out_specs=pl.BlockSpec((TBS, 128), lambda h, b, k: (b, h)),
        out_shape=jax.ShapeDtypeStruct((B_pad, halves * 128), jnp.float32),
        scratch_shapes=[pltpu.VMEM((rows_blk, 128), jnp.float32)],
        compiler_params=pltpu.CompilerParams(
            dimension_semantics=("parallel", "parallel", "arbitrary"),
            vmem_limit_bytes=32 * 1024 * 1024,
        ),
        cost_estimate=pl.CostEstimate(
            flops=3 * B_pad * D_pad,
            transcendentals=0,
            bytes_accessed=int(xf.size * xf.dtype.itemsize
                               + gf.size * gf.dtype.itemsize
                               + 4 * B_pad * halves * 128),
        ),
    )(xf, gf)

    # Combine per-half partial SSEs, drop padded samples, finalize PSNR.
    sse = out.reshape(B_pad, halves, 128)[:, :, 0].sum(axis=1)[:B]
    mse = sse * (1.0 / D)                   # original (unpadded) element count
    # mse == 0 -> log10 -> -inf -> PSNR = +inf, matching torch -10*log10(mse).
    return -10.0 * jnp.log10(mse)


class Evaluator:
    """JAX/Pallas port of the PyTorch Evaluator forward pass."""

    def __init__(self, gt, measurement, eval_fn_lists=("psnr",)):
        self.gt = gt
        self.measurement = measurement  # kept for API parity; unused by PSNR
        self.eval_fn = {}
        for name in eval_fn_lists:
            if name == "psnr":
                self.eval_fn[name] = self._psnr
            else:
                # TODO(synk): other metrics (e.g. 'lpips') need pretrained weights.
                continue
        self.main_eval_fn_name = eval_fn_lists[0]

    def _psnr(self, x):
        gt = self.gt
        if gt.ndim == x.ndim - 1:
            gt = gt[None]              # unbatched gt -> shared across the batch
        # A shared gt stays (1, ...) so the kernel reads it once per tile
        # instead of B times from HBM.
        return psnr_pallas(x, gt)

    def get_main_eval_fn(self):
        return self.eval_fn[self.main_eval_fn_name]

    def forward(self, x, reduction="mean"):
        results = {}
        for name, fn in self.eval_fn.items():
            v = fn(x)
            results[name] = v.mean() if reduction == "mean" else v
        return results

    __call__ = forward


def _psnr_reference(x, gt):
    """Pure-JAX reference for verification."""
    gt = jnp.broadcast_to(gt, x.shape)
    d = (x - gt).astype(jnp.float32)
    mse = jnp.mean(d * d, axis=tuple(range(1, x.ndim)))
    return -10.0 * jnp.log10(mse)


if __name__ == "__main__":
    key = jax.random.PRNGKey(0)
    keys = jax.random.split(key, 8)

    # --- test 1: spec-sized input, per-sample gt ---------------------------
    B, C, H, W = 2, 4, 16, 16
    gt = jax.random.uniform(keys[0], (B, C, H, W), dtype=jnp.float32)
    measurement = jax.random.uniform(keys[1], (B, C, H, W), dtype=jnp.float32)
    x = jnp.clip(gt + 0.05 * jax.random.normal(keys[2], (B, C, H, W)), 0.0, 1.0)

    evaluator = Evaluator(gt, measurement, eval_fn_lists=("psnr",))
    per_sample = evaluator(x, reduction="none")["psnr"]
    mean_result = evaluator(x, reduction="mean")["psnr"]
    jax.block_until_ready(per_sample)
    jax.block_until_ready(mean_result)
    ref = _psnr_reference(x, gt)
    assert jnp.allclose(per_sample, ref, rtol=1e-4, atol=1e-4), (per_sample, ref)
    assert jnp.allclose(mean_result, ref.mean(), rtol=1e-4, atol=1e-4)

    # --- test 2: shared (batch-1) ground truth ------------------------------
    ev2 = Evaluator(gt[:1], measurement, eval_fn_lists=("psnr",))
    got2 = ev2(x, reduction="none")["psnr"]
    jax.block_until_ready(got2)
    ref2 = _psnr_reference(x, gt[:1])
    assert jnp.allclose(got2, ref2, rtol=1e-4, atol=1e-4), (got2, ref2)

    # --- test 3: larger image -> R=16 packing path --------------------------
    gt3 = jax.random.uniform(keys[3], (2, 3, 128, 128), dtype=jnp.float32)
    x3 = jnp.clip(gt3 + 0.1 * jax.random.normal(keys[4], (2, 3, 128, 128)), 0.0, 1.0)
    ev3 = Evaluator(gt3, gt3, eval_fn_lists=("psnr",))
    got3 = ev3(x3, reduction="none")["psnr"]
    jax.block_until_ready(got3)
    ref3 = _psnr_reference(x3, gt3)
    assert jnp.allclose(got3, ref3, rtol=1e-4, atol=1e-4), (got3, ref3)

    # --- test 4: large D -> two parallel lane halves (v7x dual-core path) ---
    gt4 = jax.random.uniform(keys[5], (2, 3, 256, 256), dtype=jnp.float32)
    x4 = jnp.clip(gt4 + 0.1 * jax.random.normal(keys[6], (2, 3, 256, 256)), 0.0, 1.0)
    ev4 = Evaluator(gt4, gt4, eval_fn_lists=("psnr",))
    got4 = ev4(x4, reduction="none")["psnr"]
    jax.block_until_ready(got4)
    ref4 = _psnr_reference(x4, gt4)
    assert jnp.allclose(got4, ref4, rtol=1e-4, atol=1e-4), (got4, ref4)

    # --- test 5: D not a multiple of 1024 -> zero-padded feature dim --------
    gt5 = jax.random.uniform(keys[7], (2, 3, 10, 10), dtype=jnp.float32)
    x5 = jnp.clip(gt5 + 0.05, 0.0, 1.0)
    ev5 = Evaluator(gt5, gt5, eval_fn_lists=("psnr",))
    got5 = ev5(x5, reduction="none")["psnr"]
    jax.block_until_ready(got5)
    ref5 = _psnr_reference(x5, gt5)
    assert jnp.allclose(got5, ref5, rtol=1e-4, atol=1e-4), (got5, ref5)

    print("KERNEL_OK")
</pallas_src>

<mosaic_0001>
module attributes {stable_mosaic.version = 11 : i64} {
  func.func @_sse_kernel(%arg0: i32, %arg1: i32, %arg2: i32, %arg3: memref<16x128xf32, #tpu.memory_space<vmem>>, %arg4: memref<16x128xf32, #tpu.memory_space<vmem>>, %arg5: memref<2x128xf32, #tpu.memory_space<vmem>>, %arg6: memref<16x128xf32, #tpu.memory_space<vmem>>) attributes {dimension_semantics = [#tpu.dimension_semantics<parallel>, #tpu.dimension_semantics<parallel>, #tpu.dimension_semantics<arbitrary>], iteration_bounds = array<i64: 1, 1, 1>, scalar_prefetch = 0 : i64, scratch_operands = 1 : i64, tpu.core_type = #tpu.core_type<tc>, window_params = [{transform_indices = @transform_0, window_bounds = array<i64: 16, 128>}, {transform_indices = @transform_1, window_bounds = array<i64: 16, 128>}, {transform_indices = @transform_2, window_bounds = array<i64: 2, 128>}]} {
    %c0_i32 = arith.constant 0 : i32
    %0 = arith.cmpi eq, %arg2, %c0_i32 : i32
    %1 = arith.extui %0 : i1 to i32
    %c0_i32_0 = arith.constant 0 : i32
    %2 = arith.cmpi ne, %1, %c0_i32_0 : i32
    scf.if %2 {
      %cst = arith.constant 0.000000e+00 : f32
      %13 = vector.broadcast %cst : f32 to vector<16x128xf32>
      %c0_10 = arith.constant 0 : index
      %c0_11 = arith.constant 0 : index
      %14 = vector.load %arg6[%c0_10, %c0_11] : memref<16x128xf32, #tpu.memory_space<vmem>>, vector<16x128xf32>
      tpu.vector_store %arg6[%c0_10, %c0_11], %13 {strides = array<i32>} : memref<16x128xf32, #tpu.memory_space<vmem>>, vector<16x128xf32>,
    } else {
    }
    %c0 = arith.constant 0 : index
    %c0_1 = arith.constant 0 : index
    %3 = vector.load %arg3[%c0, %c0_1] : memref<16x128xf32, #tpu.memory_space<vmem>>, vector<16x128xf32>
    %c0_2 = arith.constant 0 : index
    %c0_3 = arith.constant 0 : index
    %4 = vector.load %arg4[%c0_2, %c0_3] : memref<16x128xf32, #tpu.memory_space<vmem>>, vector<16x128xf32>
    %5 = arith.subf %3, %4 : vector<16x128xf32>
    %6 = arith.mulf %5, %5 : vector<16x128xf32>
    %c0_4 = arith.constant 0 : index
    %c0_5 = arith.constant 0 : index
    %7 = vector.load %arg6[%c0_4, %c0_5] : memref<16x128xf32, #tpu.memory_space<vmem>>, vector<16x128xf32>
    %8 = arith.addf %7, %6 : vector<16x128xf32>
    %c0_6 = arith.constant 0 : index
    %c0_7 = arith.constant 0 : index
    %9 = vector.load %arg6[%c0_6, %c0_7] : memref<16x128xf32, #tpu.memory_space<vmem>>, vector<16x128xf32>
    tpu.vector_store %arg6[%c0_6, %c0_7], %8 {strides = array<i32>} : memref<16x128xf32, #tpu.memory_space<vmem>>, vector<16x128xf32>,
    %c0_i32_8 = arith.constant 0 : i32
    %10 = arith.cmpi eq, %arg2, %c0_i32_8 : i32
    %11 = arith.extui %10 : i1 to i32
    %c0_i32_9 = arith.constant 0 : i32
    %12 = arith.cmpi ne, %11, %c0_i32_9 : i32
    scf.if %12 {
      %c0_10 = arith.constant 0 : index
      %c0_11 = arith.constant 0 : index
      %13 = vector.load %arg6[%c0_10, %c0_11] : memref<16x128xf32, #tpu.memory_space<vmem>>, vector<16x128xf32>
      %14 = vector.shape_cast %13 : vector<16x128xf32> to vector<2x8x128xf32>
      %cst = arith.constant dense<0.000000e+00> : vector<2x128xf32>
      %15 = vector.multi_reduction <add>, %14, %cst [1] : vector<2x8x128xf32> to vector<2x128xf32>
      %cst_12 = arith.constant dense<0.000000e+00> : vector<2xf32>
      %16 = vector.multi_reduction <add>, %15, %cst_12 [1] : vector<2x128xf32> to vector<2xf32>
      %17 = vector.shape_cast %16 : vector<2xf32> to vector<2x1xf32>
      %18 = vector.shape_cast %17 : vector<2x1xf32> to vector<2x1xf32>
      %19 = vector.broadcast %18 : vector<2x1xf32> to vector<2x128xf32>
      %c0_13 = arith.constant 0 : index
      %c0_14 = arith.constant 0 : index
      %20 = vector.load %arg5[%c0_13, %c0_14] : memref<2x128xf32, #tpu.memory_space<vmem>>, vector<2x128xf32>
      tpu.vector_store %arg5[%c0_13, %c0_14], %19 {strides = array<i32>} : memref<2x128xf32, #tpu.memory_space<vmem>>, vector<2x128xf32>,
    } else {
    }
    return
  }
  func.func @transform_0(%arg0: i32, %arg1: i32, %arg2: i32) -> (i32, i32) {
    %c1_i32 = arith.constant 1 : i32
    %0 = arith.muli %arg0, %c1_i32 : i32
    %1 = arith.addi %0, %arg2 : i32
    %c0_i32 = arith.constant 0 : i32
    return %arg1, %1 : i32, i32
  }
  func.func @transform_1(%arg0: i32, %arg1: i32, %arg2: i32) -> (i32, i32) {
    %c1_i32 = arith.constant 1 : i32
    %0 = arith.muli %arg0, %c1_i32 : i32
    %1 = arith.addi %0, %arg2 : i32
    %c0_i32 = arith.constant 0 : i32
    return %arg1, %1 : i32, i32
  }
  func.func @transform_2(%arg0: i32, %arg1: i32, %arg2: i32) -> (i32, i32) {
    %c0_i32 = arith.constant 0 : i32
    return %arg1, %arg0 : i32, i32
  }
}

</mosaic_0001>

<llo_original>
// kernel: tpu_custom_call.1
$region0: #{tpu_custom_call.1}
  #allocation0 [shape = 'u32[]', space=smem, size = 0x4, offset = 0x4, fixed_abs, tag = 'smem constant byte address 0x4 - core index']
  #allocation1 [shape = 'u32[144,128]{1,0:T(1,128)}', space=vmem, size = 0x12000, scoped, tag = 'internal scratch']
  #allocation2 [shape = 'f32[16,128]{1,0:T(8,128)}', space=vmem, size = 0x2000, scoped, tag = 'scratch operand']
  %s0 = inlined_call_operand.hbm [shape: f32[16,128], index: 0, kind: input, shape index: {}]
  %s1 = inlined_call_operand.hbm [shape: f32[16,128], index: 1, kind: input, shape index: {}]
  %s2 = inlined_call_operand.hbm [shape: f32[2,128], index: 2, kind: output, shape index: {}]
  %s3 = sld [smem:[#allocation0]]
  $region34: #{tpu_custom_call.1} parent=0
    _
  %s5 = ssub.s32 1, %s3
  %s6 = scalar_select 0, %s5, %s3
  $region1: #{tpu_custom_call.1} parent=0
    #allocation3 [shape = 'u8[8192]{0}', space=vmem, size = 0x2000, scoped, tag = 'input window, operand 0, single buffered']
    #allocation4 [shape = 's32[1]{0}', space=sflag, size = 0x4, scoped, tag = 'scoped memory for tpu_custom_call.1']
    #allocation5 [shape = 's32[1]{0}', space=sflag, size = 0x4, scoped, tag = 'scoped memory for tpu_custom_call.1']
    #allocation6 [shape = 'u8[8192]{0}', space=vmem, size = 0x2000, scoped, tag = 'input window, operand 1, single buffered']
    #allocation7 [shape = 's32[1]{0}', space=sflag, size = 0x4, scoped, tag = 'scoped memory for tpu_custom_call.1']
    #allocation8 [shape = 'u8[1024]{0}', space=vmem, size = 0x400, scoped, tag = 'output window, operand 0, single buffered']
    %7 = vsyncpa [#allocation4], 0
    %8 = vsyncpa [#allocation7], 0
    %9 = vsyncpa [#allocation5], 0
    // Predicated region
    $region2: #{tpu_custom_call.1} parent=1 // pred_check
      _
    $region3: #{tpu_custom_call.1} parent=1 // pred_check_branch
      %11 = sbr.rel (0) target = $region5
    $region4: #{tpu_custom_call.1} parent=1 // pred_region
      %s12 = sadd.s32 0, 0
      %s14 = ssub.s32 256, 256
      %15 = vsyncadd [#allocation4], %s14
      %s16 = smul.addr %s12, 128
      %s17 = scalar_lea.hbm %s0, %s16
      %s18 = sshll.u32 [#allocation3], 4
      %s19 = int_to_ptr.vmem [resolvable:$true] %s18
      %24 = dma.hbm_to_vmem [thread:$0]  %s17, 256, %s19, [#allocation4], 128, 128, 8
    $region5: #{tpu_custom_call.1} parent=1 // pred_fallthru
      _
    // Predicated region
    $region6: #{tpu_custom_call.1} parent=1 // pred_check
      _
    $region7: #{tpu_custom_call.1} parent=1 // pred_check_branch
      %26 = sbr.rel (0) target = $region9
    $region8: #{tpu_custom_call.1} parent=1 // pred_region
      %s27 = sadd.s32 0, 0
      %s29 = ssub.s32 256, 256
      %30 = vsyncadd [#allocation7], %s29
      %s31 = smul.addr %s27, 128
      %s32 = scalar_lea.hbm %s1, %s31
      %s33 = sshll.u32 [#allocation6], 4
      %s34 = int_to_ptr.vmem [resolvable:$true] %s33
      %39 = dma.hbm_to_vmem [thread:$0]  %s32, 256, %s34, [#allocation7], 128, 128, 8
    $region9: #{tpu_custom_call.1} parent=1 // pred_fallthru
      _
    // Predicated region
    $region10: #{tpu_custom_call.1} parent=1 // pred_check
      _
    $region11: #{tpu_custom_call.1} parent=1 // pred_check_branch
      %41 = sbr.rel (0) target = $region13
    $region12: #{tpu_custom_call.1} parent=1 // pred_region
      %42 = dma.done [#allocation4], 256
    $region13: #{tpu_custom_call.1} parent=1 // pred_fallthru
      _
    // Predicated region
    $region14: #{tpu_custom_call.1} parent=1 // pred_check
      _
    $region15: #{tpu_custom_call.1} parent=1 // pred_check_branch
      %44 = sbr.rel (0) target = $region17
    $region16: #{tpu_custom_call.1} parent=1 // pred_region
      %45 = dma.done [#allocation7], 256
    $region17: #{tpu_custom_call.1} parent=1 // pred_fallthru
      _
    %s46 = sadd.s32 0, 0
    %s47 = sadd.s32 0, 0
    %p48 = scmp.eq.s32.totalorder 0, 0
    // Predicated region
    $region18: #{tpu_custom_call.1} parent=1 // pred_check
      %p49 = pneg %p48
    $region19: #{tpu_custom_call.1} parent=1 // pred_check_branch
      %51 = sbr.rel (%p49) target = $region21
    $region20: #{tpu_custom_call.1} parent=1 // pred_region
      %52 = vst [vmem:[#allocation2] sm:$0xff] 0.0
      %53 = vst [vmem:[#allocation2 + $0x8] sm:$0xff] 0.0
    $region21: #{tpu_custom_call.1} parent=1 // pred_fallthru
      _
    %v54 = vld [vmem:[#allocation3] sm:$0xff]
    %v55 = vld [vmem:[#allocation3 + $0x8] sm:$0xff]
    %v56 = vld [vmem:[#allocation6] sm:$0xff]
    %v57 = vld [vmem:[#allocation6 + $0x8] sm:$0xff]
    %v58 = vsub.f32 %v54, %v56
    %v59 = vsub.f32 %v55, %v57
    %v60 = vmul.f32 %v58, %v58
    %v61 = vmul.f32 %v59, %v59
    %v62 = vld [vmem:[#allocation2] sm:$0xff]
    %v63 = vld [vmem:[#allocation2 + $0x8] sm:$0xff]
    %v64 = vadd.f32 %v62, %v60
    %v65 = vadd.f32 %v63, %v61
    %66 = vst [vmem:[#allocation2] sm:$0xff] %v64
    %67 = vst [vmem:[#allocation2 + $0x8] sm:$0xff] %v65
    // Predicated region
    $region22: #{tpu_custom_call.1} parent=1 // pred_check
      %p68 = pneg %p48
    $region23: #{tpu_custom_call.1} parent=1 // pred_check_branch
      %70 = sbr.rel (%p68) target = $region25
    $region24: #{tpu_custom_call.1} parent=1 // pred_region
      %v71 = vld [vmem:[#allocation2] sm:$0xff]
      %v72 = vld [vmem:[#allocation2 + $0x8] sm:$0xff]
      %v73 = vrot.slane %v71, 4
      %v74 = vadd.f32 %v71, %v73
      %v75 = vrot.slane %v74, 2
      %v76 = vadd.f32 %v74, %v75
      %v77 = vrot.slane %v76, 1
      %v78 = vadd.f32 %v76, %v77
      %v79 = vrot.slane %v72, 4
      %v80 = vadd.f32 %v72, %v79
      %v81 = vrot.slane %v80, 2
      %v82 = vadd.f32 %v80, %v81
      %v83 = vrot.slane %v82, 1
      %v84 = vadd.f32 %v82, %v83
      %vm87 = vcmask 1041409
      %v88 = vsel %vm87, %v84, %v78
      %vm90 = vcmask 1041408
      %v91 = vsel %vm90, %v88, 0.0
      %92 = vadd.xlane.f32.xlu0 %v91
      %v93 = vpop.xlane.xlu0 %92
      %94 = vst [vmem:[#allocation8] sm:$0x3] %v93
    $region25: #{tpu_custom_call.1} parent=1 // pred_fallthru
      _
    // Predicated region
    $region26: #{tpu_custom_call.1} parent=1 // pred_check
      _
    $region27: #{tpu_custom_call.1} parent=1 // pred_check_branch
      %96 = sbr.rel (0) target = $region29
    $region28: #{tpu_custom_call.1} parent=1 // pred_region
      %s98 = ssub.s32 32, 32
      %99 = vsyncadd [#allocation5], %s98
      %s101 = sshll.u32 [#allocation8], 4
      %s102 = int_to_ptr.vmem [resolvable:$true] %s101
      %104 = dma.vmem_to_hbm [thread:$0]  %s102, 32, %s2, [#allocation5]
    $region29: #{tpu_custom_call.1} parent=1 // pred_fallthru
      _
    // Predicated region
    $region30: #{tpu_custom_call.1} parent=1 // pred_check
      _
    $region31: #{tpu_custom_call.1} parent=1 // pred_check_branch
      %106 = sbr.rel (0) target = $region33
    $region32: #{tpu_custom_call.1} parent=1 // pred_region
      %107 = dma.done [#allocation5], 32
    $region33: #{tpu_custom_call.1} parent=1 // pred_fallthru
      _
    %108 = vsyncpa [#allocation4], 1
    %109 = vsyncpa [#allocation7], 1
    %110 = vsyncpa [#allocation5], 1

</llo_original>
